<compile_context>
chip_gen: v5e
topology: v5e:2x2
jax: 0.10.0
libtpu: 0.0.40
codegen_flags: <defaults>
</compile_context>

<pallas_src>
import jax
import jax.numpy as jnp
from jax import lax
from jax.experimental import pallas as pl
from jax.experimental.pallas import tpu as pltpu


def _make_kernel(k, d, tt, t_total):
    """Kernel closure over static ints: K codes, D channels, TT tile, true T."""

    def kernel(x_ref, cb_ref, cbt_ref, cb2h_ref, iotak_ref, vcol_ref,
               xd_ref, counts_ref, sqerr_ref):
        # x_ref:      (1, D, TT)  token tile in native (N, C, T) layout
        # cb_ref:     (K, D)      codebook (resident)
        # cbt_ref:    (D, K)      codebook transpose (resident, hoisted)
        # cb2h_ref:   (K, 1)      0.5 * ||cb||^2 (resident, hoisted)
        # iotak_ref:  (K, 1)      code-index iota (resident, hoisted)
        # vcol_ref:   (TT, 1)     1.0 for valid tokens of this tile else 0.0
        # xd_ref:     (1, D, TT)  dequantized tile, written in NCT layout
        # counts_ref: (1, 1, K, 1) per-(batch, tile) partial code counts
        # sqerr_ref:  (1, 1, 1, 1) per-(batch, tile) partial squared error
        ti = pl.program_id(1)

        # Valid-lane row for the (possibly ragged) final tile; zero x there so
        # every downstream value stays finite regardless of OOB block contents.
        lane = lax.broadcasted_iota(jnp.int32, (1, tt), 1)
        valid_row = (ti * tt + lane) < t_total                          # (1, TT)
        x = jnp.where(valid_row, x_ref[0].astype(jnp.float32), 0.0)     # (D, TT)

        cb = cb_ref[...]            # (K, D)
        cbt = cbt_ref[...]          # (D, K)
        cb2h = cb2h_ref[...]        # (K, 1)
        iotak = iotak_ref[...]      # (K, 1) int32
        vcol = vcol_ref[...]        # (TT, 1)

        # argmin ||x - cb||^2  ==  argmax (cb.x - 0.5*||cb||^2); exact scaling.
        scores = jnp.dot(cb, x, preferred_element_type=jnp.float32)     # (K, TT)
        adj = scores - cb2h                                              # (K, TT)

        # First-max over the code (sublane) axis — matches torch.min tie-break.
        max_a = jnp.max(adj, axis=0, keepdims=True)                      # (1, TT)
        cand = jnp.where(adj >= max_a, iotak, k)                         # (K, TT)
        code_idx = jnp.min(cand, axis=0, keepdims=True)                  # (1, TT)
        onehot = (iotak == code_idx).astype(jnp.float32)                 # (K, TT)

        # Dequantize straight into channels-first layout: (D,K)@(K,TT)->(D,TT).
        x_d = jnp.dot(cbt, onehot, preferred_element_type=jnp.float32)
        xd_ref[...] = x_d.reshape(1, d, tt).astype(xd_ref.dtype)

        # Per-code counts on the MXU in natural shape (no onehot transpose).
        counts_col = jnp.dot(onehot, vcol, preferred_element_type=jnp.float32)  # (K,1)
        counts_ref[...] = counts_col.reshape(1, 1, k, 1)

        # Commit-loss partial: contract the token axis on the MXU, tiny reduce.
        diff = x - x_d
        per_d = jnp.dot(diff * diff, vcol, preferred_element_type=jnp.float32)  # (D,1)
        sqerr_ref[...] = jnp.sum(per_d).reshape(1, 1, 1, 1)

    return kernel


def quantize_ema_forward(x, codebook, *, tt_max=2048):
    """Eval-mode forward of QuantizeEMA.

    x:        (N, code_dim, T) float (f32 or bf16; upcast happens in-kernel)
    codebook: (nb_code, code_dim) float
    returns (x_d, commit_loss, perplexity) with x_d shaped (N, code_dim, T).
    """
    n, d, t = x.shape
    k = codebook.shape[0]

    cb = codebook.astype(jnp.float32)
    cbt = cb.T                                            # (D, K) hoisted, resident
    cb2h = 0.5 * jnp.sum(cb * cb, axis=1, keepdims=True)  # (K, 1) hoisted, resident
    iotak = jnp.arange(k, dtype=jnp.int32).reshape(k, 1)  # (K, 1) hoisted, resident

    # Token tile along T (lanes). Large T: tt_max-token tiles (multiple of 128);
    # small T: one full-extent tile. No padding of x — the ragged final tile is
    # handled by the in-kernel masks and clipped output writeback.
    tt = t if t <= tt_max else tt_max
    n_tt = pl.cdiv(t, tt)
    vcol = (jnp.arange(n_tt * tt, dtype=jnp.int32) < t).astype(
        jnp.float32).reshape(n_tt * tt, 1)               # tiny valid-token column

    kernel = _make_kernel(k, d, tt, t)

    xd, counts, sqerr = pl.pallas_call(
        kernel,
        out_shape=(
            jax.ShapeDtypeStruct((n, d, t), x.dtype),
            jax.ShapeDtypeStruct((n, n_tt, k, 1), jnp.float32),
            jax.ShapeDtypeStruct((n, n_tt, 1, 1), jnp.float32),
        ),
        grid_spec=pltpu.PrefetchScalarGridSpec(
            num_scalar_prefetch=0,
            grid=(n, n_tt),
            in_specs=[
                pl.BlockSpec((1, d, tt), lambda ni, ti: (ni, 0, ti)),  # x tile (NCT)
                pl.BlockSpec((k, d), lambda ni, ti: (0, 0)),           # codebook
                pl.BlockSpec((d, k), lambda ni, ti: (0, 0)),           # codebook^T
                pl.BlockSpec((k, 1), lambda ni, ti: (0, 0)),           # 0.5*||cb||^2
                pl.BlockSpec((k, 1), lambda ni, ti: (0, 0)),           # code iota
                pl.BlockSpec((tt, 1), lambda ni, ti: (ti, 0)),         # valid column
            ],
            out_specs=[
                pl.BlockSpec((1, d, tt), lambda ni, ti: (ni, 0, ti)),      # x_d (NCT)
                pl.BlockSpec((1, 1, k, 1), lambda ni, ti: (ni, ti, 0, 0)), # counts part
                pl.BlockSpec((1, 1, 1, 1), lambda ni, ti: (ni, ti, 0, 0)), # sqerr part
            ],
        ),
        compiler_params=pltpu.CompilerParams(
            dimension_semantics=("parallel", "parallel"),
        ),
    )(x, cb, cbt, cb2h, iotak, vcol)

    # Scalar glue (matches compute_perplexity / mse_loss semantics).
    counts_k = jnp.sum(counts, axis=(0, 1, 3))                # (K,)
    prob = counts_k / jnp.sum(counts_k)
    perplexity = jnp.exp(-jnp.sum(prob * jnp.log(prob + 1e-7)))
    commit_loss = jnp.sum(sqerr) / (n * t * d)

    # Eval-mode: forward value of x + stop_gradient(x_d - x) equals x_d; return
    # x_d directly and skip the extra elementwise HBM pass.
    # TODO(synk): training-mode straight-through gradient / EMA update omitted.
    return xd, commit_loss, perplexity


def _reference(x, codebook):
    """Pure-JAX mirror of the PyTorch eval forward (for correctness check)."""
    n, d, t = x.shape
    xf = jnp.transpose(x, (0, 2, 1)).reshape(-1, d).astype(jnp.float32)
    cb = codebook.astype(jnp.float32)
    dist = (jnp.sum(xf ** 2, axis=-1, keepdims=True)
            - 2.0 * xf @ cb.T
            + jnp.sum(cb ** 2, axis=-1)[None, :])
    idx = jnp.argmin(dist, axis=-1)
    xd = cb[idx]
    counts = jnp.zeros(cb.shape[0], jnp.float32).at[idx].add(1.0)
    prob = counts / jnp.sum(counts)
    perplexity = jnp.exp(-jnp.sum(prob * jnp.log(prob + 1e-7)))
    commit_loss = jnp.mean((xf - xd) ** 2)
    x_st = (xf + lax.stop_gradient(xd - xf)).reshape(n, t, d).transpose(0, 2, 1)
    return x_st, commit_loss, perplexity


if __name__ == "__main__":
    # Module hyperparameters (synthetic, deterministic init).
    nb_code = 128
    code_dim = 32
    mu = 0.99  # EMA decay (training-only buffer updates; eval forward here)

    key = jax.random.PRNGKey(0)
    k_x, k_cb, k_x2 = jax.random.split(key, 3)
    codebook = jax.random.normal(k_cb, (nb_code, code_dim), dtype=jnp.float32)

    # Case 1: small single-tile input, x of shape (N, code_dim, T).
    N, T = 2, 16
    x = jax.random.normal(k_x, (N, code_dim, T), dtype=jnp.float32)
    x_d, commit_loss, perplexity = quantize_ema_forward(x, codebook)
    jax.block_until_ready((x_d, commit_loss, perplexity))

    xr, cr, pr = _reference(x, codebook)
    assert x_d.shape == (N, code_dim, T)
    assert commit_loss.shape == ()
    assert perplexity.shape == ()
    assert jnp.allclose(x_d, xr, atol=1e-4, rtol=1e-4)
    assert jnp.allclose(commit_loss, cr, atol=1e-4, rtol=1e-4)
    assert jnp.allclose(perplexity, pr, atol=1e-4, rtol=1e-4)

    # Case 2: multi-tile with a ragged final tile (exercises masked counts /
    # sqerr and clipped out-of-bounds writeback — no wrapper pad or slice).
    N2, T2 = 1, 200
    x2 = jax.random.normal(k_x2, (N2, code_dim, T2), dtype=jnp.float32)
    x_d2, cl2, pp2 = quantize_ema_forward(x2, codebook, tt_max=128)
    jax.block_until_ready((x_d2, cl2, pp2))

    xr2, cr2, pr2 = _reference(x2, codebook)
    assert x_d2.shape == (N2, code_dim, T2)
    assert jnp.allclose(x_d2, xr2, atol=1e-4, rtol=1e-4)
    assert jnp.allclose(cl2, cr2, atol=1e-4, rtol=1e-4)
    assert jnp.allclose(pp2, pr2, atol=1e-4, rtol=1e-4)

    print("KERNEL_OK")
</pallas_src>

<mosaic_0001>
module attributes {stable_mosaic.version = 11 : i64} {
  func.func @kernel(%arg0: i32, %arg1: i32, %arg2: memref<1x32x16xf32, #tpu.memory_space<vmem>>, %arg3: memref<128x32xf32, #tpu.memory_space<vmem>>, %arg4: memref<32x128xf32, #tpu.memory_space<vmem>>, %arg5: memref<128x1xf32, #tpu.memory_space<vmem>>, %arg6: memref<128x1xi32, #tpu.memory_space<vmem>>, %arg7: memref<16x1xf32, #tpu.memory_space<vmem>>, %arg8: memref<1x32x16xf32, #tpu.memory_space<vmem>>, %arg9: memref<1x1x128x1xf32, #tpu.memory_space<vmem>>, %arg10: memref<1x1x1x1xf32, #tpu.memory_space<vmem>>) attributes {dimension_semantics = [#tpu.dimension_semantics<parallel>, #tpu.dimension_semantics<parallel>], iteration_bounds = array<i64: 2, 1>, scalar_prefetch = 0 : i64, scratch_operands = 0 : i64, tpu.core_type = #tpu.core_type<tc>, window_params = [{transform_indices = @transform_0, window_bounds = array<i64: 1, 32, 16>}, {pipeline_mode = #tpu.pipeline_mode<synchronous>, transform_indices = @transform_1, window_bounds = array<i64: 128, 32>}, {pipeline_mode = #tpu.pipeline_mode<synchronous>, transform_indices = @transform_2, window_bounds = array<i64: 32, 128>}, {pipeline_mode = #tpu.pipeline_mode<synchronous>, transform_indices = @transform_3, window_bounds = array<i64: 128, 1>}, {pipeline_mode = #tpu.pipeline_mode<synchronous>, transform_indices = @transform_4, window_bounds = array<i64: 128, 1>}, {transform_indices = @transform_5, window_bounds = array<i64: 16, 1>}, {transform_indices = @transform_6, window_bounds = array<i64: 1, 32, 16>}, {transform_indices = @transform_7, window_bounds = array<i64: 1, 1, 128, 1>}, {transform_indices = @transform_8, window_bounds = array<i64: 1, 1, 1, 1>}]} {
    %0 = tpu.iota {dimensions = array<i32: 1>} : vector<1x16xi32>
    %c16_i32 = arith.constant 16 : i32
    %1 = arith.muli %arg1, %c16_i32 : i32
    %2 = vector.broadcast %1 : i32 to vector<1x16xi32>
    %3 = arith.addi %2, %0 : vector<1x16xi32>
    %c16_i32_0 = arith.constant 16 : i32
    %4 = vector.broadcast %c16_i32_0 : i32 to vector<1x16xi32>
    %5 = arith.cmpi slt, %3, %4 : vector<1x16xi32>
    %c0 = arith.constant 0 : index
    %c0_1 = arith.constant 0 : index
    %c0_2 = arith.constant 0 : index
    %6 = vector.load %arg2[%c0, %c0_1, %c0_2] : memref<1x32x16xf32, #tpu.memory_space<vmem>>, vector<1x32x16xf32>
    %7 = vector.shape_cast %6 : vector<1x32x16xf32> to vector<32x16xf32>
    %cst = arith.constant 0.000000e+00 : f32
    %8 = vector.shape_cast %5 : vector<1x16xi1> to vector<1x16xi1>
    %9 = vector.broadcast %8 : vector<1x16xi1> to vector<32x16xi1>
    %10 = vector.broadcast %cst : f32 to vector<32x16xf32>
    %11 = arith.select %9, %7, %10 : vector<32x16xi1>, vector<32x16xf32>
    %c0_3 = arith.constant 0 : index
    %c0_4 = arith.constant 0 : index
    %12 = vector.load %arg3[%c0_3, %c0_4] : memref<128x32xf32, #tpu.memory_space<vmem>>, vector<128x32xf32>
    %c0_5 = arith.constant 0 : index
    %c0_6 = arith.constant 0 : index
    %13 = vector.load %arg4[%c0_5, %c0_6] : memref<32x128xf32, #tpu.memory_space<vmem>>, vector<32x128xf32>
    %c0_7 = arith.constant 0 : index
    %c0_8 = arith.constant 0 : index
    %14 = vector.load %arg5[%c0_7, %c0_8] : memref<128x1xf32, #tpu.memory_space<vmem>>, vector<128x1xf32>
    %c0_9 = arith.constant 0 : index
    %c0_10 = arith.constant 0 : index
    %15 = vector.load %arg6[%c0_9, %c0_10] : memref<128x1xi32, #tpu.memory_space<vmem>>, vector<128x1xi32>
    %c0_11 = arith.constant 0 : index
    %c0_12 = arith.constant 0 : index
    %16 = vector.load %arg7[%c0_11, %c0_12] : memref<16x1xf32, #tpu.memory_space<vmem>>, vector<16x1xf32>
    %cst_13 = arith.constant dense<0.000000e+00> : vector<128x16xf32>
    %17 = tpu.matmul %12, %11, %cst_13 {dimension_numbers = #tpu.dot_dimension_numbers<[1], [0], [0], [1], [0, 0, 1, 1], [], []>} : vector<128x32xf32>, vector<32x16xf32>, vector<128x16xf32> -> vector<128x16xf32>
    %18 = vector.broadcast %14 : vector<128x1xf32> to vector<128x16xf32>
    %19 = arith.subf %17, %18 : vector<128x16xf32>
    %cst_14 = arith.constant dense<0xFF800000> : vector<16xf32>
    %20 = vector.multi_reduction <maximumf>, %19, %cst_14 [0] : vector<128x16xf32> to vector<16xf32>
    %21 = vector.shape_cast %20 : vector<16xf32> to vector<1x16xf32>
    %22 = vector.broadcast %21 : vector<1x16xf32> to vector<128x16xf32>
    %23 = arith.cmpf oge, %19, %22 : vector<128x16xf32>
    %c128_i32 = arith.constant 128 : i32
    %24 = vector.shape_cast %15 : vector<128x1xi32> to vector<128x1xi32>
    %25 = vector.broadcast %24 : vector<128x1xi32> to vector<128x16xi32>
    %26 = vector.broadcast %c128_i32 : i32 to vector<128x16xi32>
    %27 = arith.select %23, %25, %26 : vector<128x16xi1>, vector<128x16xi32>
    %cst_15 = arith.constant dense<2147483647> : vector<16xi32>
    %28 = vector.multi_reduction <minsi>, %27, %cst_15 [0] : vector<128x16xi32> to vector<16xi32>
    %29 = vector.shape_cast %28 : vector<16xi32> to vector<1x16xi32>
    %30 = vector.broadcast %15 : vector<128x1xi32> to vector<128x16xi32>
    %31 = vector.broadcast %29 : vector<1x16xi32> to vector<128x16xi32>
    %32 = arith.cmpi eq, %30, %31 : vector<128x16xi32>
    %33 = arith.extui %32 : vector<128x16xi1> to vector<128x16xi32>
    %34 = arith.sitofp %33 : vector<128x16xi32> to vector<128x16xf32>
    %cst_16 = arith.constant dense<0.000000e+00> : vector<32x16xf32>
    %35 = tpu.matmul %13, %34, %cst_16 {dimension_numbers = #tpu.dot_dimension_numbers<[1], [0], [0], [1], [0, 0, 1, 1], [], []>} : vector<32x128xf32>, vector<128x16xf32>, vector<32x16xf32> -> vector<32x16xf32>
    %36 = vector.shape_cast %35 : vector<32x16xf32> to vector<1x32x16xf32>
    %c0_17 = arith.constant 0 : index
    %c0_18 = arith.constant 0 : index
    %c0_19 = arith.constant 0 : index
    %37 = vector.load %arg8[%c0_17, %c0_18, %c0_19] : memref<1x32x16xf32, #tpu.memory_space<vmem>>, vector<1x32x16xf32>
    tpu.vector_store %arg8[%c0_17, %c0_18, %c0_19], %36 {strides = array<i32>} : memref<1x32x16xf32, #tpu.memory_space<vmem>>, vector<1x32x16xf32>,
    %cst_20 = arith.constant dense<0.000000e+00> : vector<128x1xf32>
    %38 = tpu.matmul %34, %16, %cst_20 {dimension_numbers = #tpu.dot_dimension_numbers<[1], [0], [0], [1], [0, 0, 1, 1], [], []>} : vector<128x16xf32>, vector<16x1xf32>, vector<128x1xf32> -> vector<128x1xf32>
    %39 = vector.shape_cast %38 : vector<128x1xf32> to vector<1x1x128x1xf32>
    %c0_21 = arith.constant 0 : index
    %c0_22 = arith.constant 0 : index
    %c0_23 = arith.constant 0 : index
    %c0_24 = arith.constant 0 : index
    %40 = vector.load %arg9[%c0_21, %c0_22, %c0_23, %c0_24] : memref<1x1x128x1xf32, #tpu.memory_space<vmem>>, vector<1x1x128x1xf32>
    tpu.vector_store %arg9[%c0_21, %c0_22, %c0_23, %c0_24], %39 {strides = array<i32>} : memref<1x1x128x1xf32, #tpu.memory_space<vmem>>, vector<1x1x128x1xf32>,
    %41 = arith.subf %11, %35 : vector<32x16xf32>
    %42 = arith.mulf %41, %41 : vector<32x16xf32>
    %cst_25 = arith.constant dense<0.000000e+00> : vector<32x1xf32>
    %43 = tpu.matmul %42, %16, %cst_25 {dimension_numbers = #tpu.dot_dimension_numbers<[1], [0], [0], [1], [0, 0, 1, 1], [], []>} : vector<32x16xf32>, vector<16x1xf32>, vector<32x1xf32> -> vector<32x1xf32>
    %44 = vector.shape_cast %43 : vector<32x1xf32> to vector<1x32x1xf32>
    %cst_26 = arith.constant dense<0.000000e+00> : vector<1xf32>
    %45 = vector.multi_reduction <add>, %44, %cst_26 [1, 2] : vector<1x32x1xf32> to vector<1xf32>
    %46 = vector.shape_cast %45 : vector<1xf32> to vector<1x1x1xf32>
    %47 = vector.extract %46[0, 0, 0] : f32 from vector<1x1x1xf32>
    %48 = vector.broadcast %47 : f32 to vector<1x1x1x1xf32>
    %c0_27 = arith.constant 0 : index
    %c0_28 = arith.constant 0 : index
    %c0_29 = arith.constant 0 : index
    %c0_30 = arith.constant 0 : index
    %49 = vector.load %arg10[%c0_27, %c0_28, %c0_29, %c0_30] : memref<1x1x1x1xf32, #tpu.memory_space<vmem>>, vector<1x1x1x1xf32>
    tpu.vector_store %arg10[%c0_27, %c0_28, %c0_29, %c0_30], %48 {strides = array<i32>} : memref<1x1x1x1xf32, #tpu.memory_space<vmem>>, vector<1x1x1x1xf32>,
    return
  }
  func.func @transform_0(%arg0: i32, %arg1: i32) -> (i32, i32, i32) {
    %c0_i32 = arith.constant 0 : i32
    %c0_i32_0 = arith.constant 0 : i32
    return %arg0, %c0_i32, %arg1 : i32, i32, i32
  }
  func.func @transform_1(%arg0: i32, %arg1: i32) -> (i32, i32) {
    %c0_i32 = arith.constant 0 : i32
    %c0_i32_0 = arith.constant 0 : i32
    %c0_i32_1 = arith.constant 0 : i32
    return %c0_i32, %c0_i32_0 : i32, i32
  }
  func.func @transform_2(%arg0: i32, %arg1: i32) -> (i32, i32) {
    %c0_i32 = arith.constant 0 : i32
    %c0_i32_0 = arith.constant 0 : i32
    %c0_i32_1 = arith.constant 0 : i32
    return %c0_i32, %c0_i32_0 : i32, i32
  }
  func.func @transform_3(%arg0: i32, %arg1: i32) -> (i32, i32) {
    %c0_i32 = arith.constant 0 : i32
    %c0_i32_0 = arith.constant 0 : i32
    %c0_i32_1 = arith.constant 0 : i32
    return %c0_i32, %c0_i32_0 : i32, i32
  }
  func.func @transform_4(%arg0: i32, %arg1: i32) -> (i32, i32) {
    %c0_i32 = arith.constant 0 : i32
    %c0_i32_0 = arith.constant 0 : i32
    %c0_i32_1 = arith.constant 0 : i32
    return %c0_i32, %c0_i32_0 : i32, i32
  }
  func.func @transform_5(%arg0: i32, %arg1: i32) -> (i32, i32) {
    %c0_i32 = arith.constant 0 : i32
    %c0_i32_0 = arith.constant 0 : i32
    return %arg1, %c0_i32 : i32, i32
  }
  func.func @transform_6(%arg0: i32, %arg1: i32) -> (i32, i32, i32) {
    %c0_i32 = arith.constant 0 : i32
    %c0_i32_0 = arith.constant 0 : i32
    return %arg0, %c0_i32, %arg1 : i32, i32, i32
  }
  func.func @transform_7(%arg0: i32, %arg1: i32) -> (i32, i32, i32, i32) {
    %c0_i32 = arith.constant 0 : i32
    %c0_i32_0 = arith.constant 0 : i32
    %c0_i32_1 = arith.constant 0 : i32
    return %arg0, %arg1, %c0_i32, %c0_i32_0 : i32, i32, i32, i32
  }
  func.func @transform_8(%arg0: i32, %arg1: i32) -> (i32, i32, i32, i32) {
    %c0_i32 = arith.constant 0 : i32
    %c0_i32_0 = arith.constant 0 : i32
    %c0_i32_1 = arith.constant 0 : i32
    return %arg0, %arg1, %c0_i32, %c0_i32_0 : i32, i32, i32, i32
  }
}

</mosaic_0001>

<llo_original>
// kernel: tpu_custom_call.1
$region0: #{tpu_custom_call.1}
  #allocation0 [shape = 'u32[]', space=smem, size = 0x4, offset = 0x4, fixed_abs, tag = 'smem constant byte address 0x4 - core index']
  #allocation1 [shape = 'u32[72,128]{1,0:T(1,128)}', space=vmem, size = 0x9000, scoped, tag = 'internal scratch']
  %s0 = inlined_call_operand.vmem [shape: f32[2,32,16], index: 0, kind: input, shape index: {}]
  %s1 = inlined_call_operand.vmem [shape: f32[128,32], index: 1, kind: input, shape index: {}]
  %s2 = inlined_call_operand.vmem [shape: f32[32,128], index: 2, kind: input, shape index: {}]
  %s3 = inlined_call_operand.vmem [shape: f32[128,1], index: 3, kind: input, shape index: {}]
  %s4 = inlined_call_operand.vmem [shape: s32[128,1], index: 4, kind: input, shape index: {}]
  %s5 = inlined_call_operand.vmem [shape: f32[16,1], index: 5, kind: input, shape index: {}]
  %s6 = inlined_call_operand.vmem [shape: f32[2,32,16], index: 6, kind: output, shape index: {0}]
  %s7 = inlined_call_operand.vmem [shape: f32[2,1,128,1], index: 7, kind: output, shape index: {1}]
  %s8 = inlined_call_operand.vmem [shape: f32[2,1,1,1], index: 8, kind: output, shape index: {2}]
  %9 = xla_tuple %s6, %s7, %s8
  %s10 = sld [smem:[#allocation0]]
  $region73: #{tpu_custom_call.1} parent=0
    _
  %s12 = ssub.s32 1, %s10
  %s13 = scalar_select 0, %s12, %s10
  loop: start=0, step=1, limit=4
  $region2: #{tpu_custom_call.1} parent=0 // loop_pre_header
    _
  $region3: #{tpu_custom_call.1} parent=0 // loop_header
    %s15 = sphi 0, %s19
    %p16 = scmp.ge.s32.totalorder %s15, 4
    %s22 = sphi 0, %s34
    %s23 = sphi 0, %s30
    %s24 = sphi 0, %s22
    %s25 = sphi 0, %s23
    %s26 = sphi 0, %s24
    %s27 = sphi 0, %s25
    %s39 = sphi 0, %s41
    %s42 = sphi 0, %s39
    %s43 = sphi 0, %s42
    %s59 = sphi 0, %s43
    %s63 = sphi 0, %s63
    %s65 = sphi 0, %s63
    %s66 = sphi 0, %s65
    %s80 = sphi 0, %s66
    %s84 = sphi 0, %s84
    %s86 = sphi 0, %s84
    %s87 = sphi 0, %s86
    %s101 = sphi 0, %s87
    %s105 = sphi 0, %s105
    %s107 = sphi 0, %s105
    %s108 = sphi 0, %s107
    %s122 = sphi 0, %s108
    %s126 = sphi 0, %s126
    %s128 = sphi 0, %s126
    %s129 = sphi 0, %s128
    %s143 = sphi 0, %s129
    %s149 = sphi 0, %s151
    %s152 = sphi 0, %s149
    %s153 = sphi 0, %s152
    %s169 = sphi 0, %s153
    %s177 = sphi 0, %s179
    %s180 = sphi 0, %s177
    %s181 = sphi 0, %s180
    %s197 = sphi 0, %s181
    %s205 = sphi 0, %s207
    %s208 = sphi 0, %s205
    %s209 = sphi 0, %s208
    %s225 = sphi 0, %s209
    %s233 = sphi 0, %s235
    %s236 = sphi 0, %s233
    %s237 = sphi 0, %s236
    %s253 = sphi 0, %s237
  $region4: #{tpu_custom_call.1} parent=0 // loop_header_branch
    %18 = sbr.rel (%p16) target = $region8
  $region5: #{tpu_custom_call.1} parent=0 // loop_body
    %s20 = ssub.s32 %s15, 1
    %s21 = ssub.s32 %s15, 2
    %s28 = sadd.s32 1, %s23
    %p29 = scmp.ge.s32.totalorder %s28, 1
    %s30 = scalar_select %p29, 0, %s28
    %s31 = sadd.s32 1, %s22
    %s32 = scalar_select %p29, %s31, %s22
    %p33 = scmp.ge.s32.totalorder %s32, 2
    %s34 = scalar_select %p33, 0, %s32
    %s35 = ssub.s32 %s22, %s34
    %s36 = ssub.s32 %s23, %s30
    %s37 = sor.u32 %s35, %s36
    %p38 = scmp.eq.s32.totalorder %s37, 0
    %s40 = sadd.s32 %s39, 1
    %s41 = scalar_select %p38, %s39, %s40
    %p44 = pneg %p38
    %p45 = scmp.eq.s32.totalorder %s15, 1
    %p46 = por %p44, %p45
    %p47 = scmp.ne.s32.totalorder %s39, %s42
    %p48 = scmp.eq.s32.totalorder %s15, 0
    %p49 = por %p47, %p48
    %p50 = scmp.ne.s32.totalorder %s39, %s42
    %p51 = scmp.eq.s32.totalorder %s20, 1
    %p52 = por %p50, %p51
    %p53 = scmp.ne.s32.totalorder %s42, %s43
    %p54 = scmp.eq.s32.totalorder %s20, 0
    %p55 = por %p53, %p54
    %p56 = scmp.ne.s32.totalorder %s42, %s43
    %p57 = scmp.eq.s32.totalorder %s21, 1
    %p58 = por %p56, %p57
    %p60 = scmp.ne.s32.totalorder %s43, %s59
    %p61 = scmp.eq.s32.totalorder %s21, 0
    %p62 = por %p60, %p61
    %s64 = sadd.s32 %s63, 1
    %p67 = scmp.eq.s32.totalorder %s15, 1
    %p68 = scmp.ne.s32.totalorder %s63, %s65
    %p69 = scmp.eq.s32.totalorder %s15, 0
    %p70 = por %p68, %p69
    %p71 = scmp.ne.s32.totalorder %s63, %s65
    %p72 = scmp.eq.s32.totalorder %s20, 1
    %p73 = por %p71, %p72
    %p74 = scmp.ne.s32.totalorder %s65, %s66
    %p75 = scmp.eq.s32.totalorder %s20, 0
    %p76 = por %p74, %p75
    %p77 = scmp.ne.s32.totalorder %s65, %s66
    %p78 = scmp.eq.s32.totalorder %s21, 1
    %p79 = por %p77, %p78
    %p81 = scmp.ne.s32.totalorder %s66, %s80
    %p82 = scmp.eq.s32.totalorder %s21, 0
    %p83 = por %p81, %p82
    %s85 = sadd.s32 %s84, 1
    %p88 = scmp.eq.s32.totalorder %s15, 1
    %p89 = scmp.ne.s32.totalorder %s84, %s86
    %p90 = scmp.eq.s32.totalorder %s15, 0
    %p91 = por %p89, %p90
    %p92 = scmp.ne.s32.totalorder %s84, %s86
    %p93 = scmp.eq.s32.totalorder %s20, 1
    %p94 = por %p92, %p93
    %p95 = scmp.ne.s32.totalorder %s86, %s87
    %p96 = scmp.eq.s32.totalorder %s20, 0
    %p97 = por %p95, %p96
    %p98 = scmp.ne.s32.totalorder %s86, %s87
    %p99 = scmp.eq.s32.totalorder %s21, 1
    %p100 = por %p98, %p99
    %p102 = scmp.ne.s32.totalorder %s87, %s101
    %p103 = scmp.eq.s32.totalorder %s21, 0
    %p104 = por %p102, %p103
    %s106 = sadd.s32 %s105, 1
    %p109 = scmp.eq.s32.totalorder %s15, 1
    %p110 = scmp.ne.s32.totalorder %s105, %s107
    %p111 = scmp.eq.s32.totalorder %s15, 0
    %p112 = por %p110, %p111
    %p113 = scmp.ne.s32.totalorder %s105, %s107
    %p114 = scmp.eq.s32.totalorder %s20, 1
    %p115 = por %p113, %p114
    %p116 = scmp.ne.s32.totalorder %s107, %s108
    %p117 = scmp.eq.s32.totalorder %s20, 0
    %p118 = por %p116, %p117
    %p119 = scmp.ne.s32.totalorder %s107, %s108
    %p120 = scmp.eq.s32.totalorder %s21, 1
    %p121 = por %p119, %p120
    %p123 = scmp.ne.s32.totalorder %s108, %s122
    %p124 = scmp.eq.s32.totalorder %s21, 0
    %p125 = por %p123, %p124
    %s127 = sadd.s32 %s126, 1
    %p130 = scmp.eq.s32.totalorder %s15, 1
    %p131 = scmp.ne.s32.totalorder %s126, %s128
    %p132 = scmp.eq.s32.totalorder %s15, 0
    %p133 = por %p131, %p132
    %p134 = scmp.ne.s32.totalorder %s126, %s128
    %p135 = scmp.eq.s32.totalorder %s20, 1
    %p136 = por %p134, %p135
    %p137 = scmp.ne.s32.totalorder %s128, %s129
    %p138 = scmp.eq.s32.totalorder %s20, 0
    %p139 = por %p137, %p138
    %p140 = scmp.ne.s32.totalorder %s128, %s129
    %p141 = scmp.eq.s32.totalorder %s21, 1
    %p142 = por %p140, %p141
    %p144 = scmp.ne.s32.totalorder %s129, %s143
    %p145 = scmp.eq.s32.totalorder %s21, 0
    %p146 = por %p144, %p145
    %s147 = ssub.s32 %s23, %s30
    %p148 = scmp.eq.s32.totalorder %s147, 0
    %s150 = sadd.s32 %s149, 1
    %s151 = scalar_select %p148, %s149, %s150
    %p154 = pneg %p148
    %p155 = scmp.eq.s32.totalorder %s15, 1
    %p156 = por %p154, %p155
    %p157 = scmp.ne.s32.totalorder %s149, %s152
    %p158 = scmp.eq.s32.totalorder %s15, 0
    %p159 = por %p157, %p158
    %p160 = scmp.ne.s32.totalorder %s149, %s152
    %p161 = scmp.eq.s32.totalorder %s20, 1
    %p162 = por %p160, %p161
    %p163 = scmp.ne.s32.totalorder %s152, %s153
    %p164 = scmp.eq.s32.totalorder %s20, 0
    %p165 = por %p163, %p164
    %p166 = scmp.ne.s32.totalorder %s152, %s153
    %p167 = scmp.eq.s32.totalorder %s21, 1
    %p168 = por %p166, %p167
    %p170 = scmp.ne.s32.totalorder %s153, %s169
    %p171 = scmp.eq.s32.totalorder %s21, 0
    %p172 = por %p170, %p171
    %s173 = ssub.s32 %s22, %s34
    %s174 = ssub.s32 %s23, %s30
    %s175 = sor.u32 %s173, %s174
    %p176 = scmp.eq.s32.totalorder %s175, 0
    %s178 = sadd.s32 %s177, 1
    %s179 = scalar_select %p176, %s177, %s178
    %p182 = pneg %p176
    %p183 = scmp.eq.s32.totalorder %s15, 1
    %p184 = por %p182, %p183
    %p185 = scmp.ne.s32.totalorder %s177, %s180
    %p186 = scmp.eq.s32.totalorder %s15, 0
    %p187 = por %p185, %p186
    %p188 = scmp.ne.s32.totalorder %s177, %s180
    %p189 = scmp.eq.s32.totalorder %s20, 1
    %p190 = por %p188, %p189
    %p191 = scmp.ne.s32.totalorder %s180, %s181
    %p192 = scmp.eq.s32.totalorder %s20, 0
    %p193 = por %p191, %p192
    %p194 = scmp.ne.s32.totalorder %s180, %s181
    %p195 = scmp.eq.s32.totalorder %s21, 1
    %p196 = por %p194, %p195
    %p198 = scmp.ne.s32.totalorder %s181, %s197
    %p199 = scmp.eq.s32.totalorder %s21, 0
    %p200 = por %p198, %p199
    %s201 = ssub.s32 %s22, %s34
    %s202 = ssub.s32 %s23, %s30
    %s203 = sor.u32 %s201, %s202
    %p204 = scmp.eq.s32.totalorder %s203, 0
    %s206 = sadd.s32 %s205, 1
    %s207 = scalar_select %p204, %s205, %s206
    %p210 = pneg %p204
    %p211 = scmp.eq.s32.totalorder %s15, 1
    %p212 = por %p210, %p211
    %p213 = scmp.ne.s32.totalorder %s205, %s208
    %p214 = scmp.eq.s32.totalorder %s15, 0
    %p215 = por %p213, %p214
    %p216 = scmp.ne.s32.totalorder %s205, %s208
    %p217 = scmp.eq.s32.totalorder %s20, 1
    %p218 = por %p216, %p217
    %p219 = scmp.ne.s32.totalorder %s208, %s209
    %p220 = scmp.eq.s32.totalorder %s20, 0
    %p221 = por %p219, %p220
    %p222 = scmp.ne.s32.totalorder %s208, %s209
    %p223 = scmp.eq.s32.totalorder %s21, 1
    %p224 = por %p222, %p223
    %p226 = scmp.ne.s32.totalorder %s209, %s225
    %p227 = scmp.eq.s32.totalorder %s21, 0
    %p228 = por %p226, %p227
    %s229 = ssub.s32 %s22, %s34
    %s230 = ssub.s32 %s23, %s30
    %s231 = sor.u32 %s229, %s230
    %p232 = scmp.eq.s32.totalorder %s231, 0
    %s234 = sadd.s32 %s233, 1
    %s235 = scalar_select %p232, %s233, %s234
    %p238 = pneg %p232
    %p239 = scmp.eq.s32.totalorder %s15, 1
    %p240 = por %p238, %p239
    %p241 = scmp.ne.s32.totalorder %s233, %s236
    %p242 = scmp.eq.s32.totalorder %s15, 0
    %p243 = por %p241, %p242
    %p244 = scmp.ne.s32.totalorder %s233, %s236
    %p245 = scmp.eq.s32.totalorder %s20, 1
    %p246 = por %p244, %p245
    %p247 = scmp.ne.s32.totalorder %s236, %s237
    %p248 = scmp.eq.s32.totalorder %s20, 0
    %p249 = por %p247, %p248
    %p250 = scmp.ne.s32.totalorder %s236, %s237
    %p251 = scmp.eq.s32.totalorder %s21, 1
    %p252 = por %p250, %p251
    %p254 = scmp.ne.s32.totalorder %s237, %s253
    %p255 = scmp.eq.s32.totalorder %s21, 0
    %p256 = por %p254, %p255
    %p257 = scmp.le.s32.totalorder 1, %s15
    %p258 = scmp.lt.s32.totalorder %s15, 3
    %p259 = pnand %p257, %p258
    %p260 = pneg %p259
    // Predicated region
    $region9: #{tpu_custom_call.1} parent=5 // pred_check
      _
    $region10: #{tpu_custom_call.1} parent=5 // pred_check_branch
      %262 = sbr.rel (%p259) target = $region12
    $region11: #{tpu_custom_call.1} parent=5 // pred_region
      %s263 = ssub.s32 %s15, 1
      // Predicated region
      $region13: #{tpu_custom_call.1} parent=11 // pred_check
        %p264 = pneg %p76
      $region14: #{tpu_custom_call.1} parent=11 // pred_check_branch
        %266 = sbr.rel (%p264) target = $region16
      $region15: #{tpu_custom_call.1} parent=11 // pred_region
        _
      $region16: #{tpu_custom_call.1} parent=11 // pred_fallthru
        _
      // Predicated region
      $region17: #{tpu_custom_call.1} parent=11 // pred_check
        %p267 = pneg %p97
      $region18: #{tpu_custom_call.1} parent=11 // pred_check_branch
        %269 = sbr.rel (%p267) target = $region20
      $region19: #{tpu_custom_call.1} parent=11 // pred_region
        _
      $region20: #{tpu_custom_call.1} parent=11 // pred_fallthru
        _
      // Predicated region
      $region21: #{tpu_custom_call.1} parent=11 // pred_check
        %p270 = pneg %p118
      $region22: #{tpu_custom_call.1} parent=11 // pred_check_branch
        %272 = sbr.rel (%p270) target = $region24
      $region23: #{tpu_custom_call.1} parent=11 // pred_region
        _
      $region24: #{tpu_custom_call.1} parent=11 // pred_fallthru
        _
      // Predicated region
      $region25: #{tpu_custom_call.1} parent=11 // pred_check
        %p273 = pneg %p139
      $region26: #{tpu_custom_call.1} parent=11 // pred_check_branch
        %275 = sbr.rel (%p273) target = $region28
      $region27: #{tpu_custom_call.1} parent=11 // pred_region
        _
      $region28: #{tpu_custom_call.1} parent=11 // pred_fallthru
        _
      // Predicated region
      $region29: #{tpu_custom_call.1} parent=11 // pred_check
        %p276 = pneg %p165
      $region30: #{tpu_custom_call.1} parent=11 // pred_check_branch
        %278 = sbr.rel (%p276) target = $region32
      $region31: #{tpu_custom_call.1} parent=11 // pred_region
        %s279 = smul.u32 2, %s25
        %p280 = scmp.lt.s32.totalorder %s279, 1
        %s281 = scalar_select %p280, %s279, 1
        %s282 = smul.addr %s281, 8
        %s283 = scalar_lea.vmem %s5, %s282
        %s284 = smul.u32 2, %s25
      $region32: #{tpu_custom_call.1} parent=11 // pred_fallthru
        _
    $region12: #{tpu_custom_call.1} parent=5 // pred_fallthru
      _
    %p285 = scmp.lt.s32.totalorder %s15, 2
    // Predicated region
    $region33: #{tpu_custom_call.1} parent=5 // pred_check
      %p286 = pneg %p285
    $region34: #{tpu_custom_call.1} parent=5 // pred_check_branch
      %288 = sbr.rel (%p286) target = $region36
    $region35: #{tpu_custom_call.1} parent=5 // pred_region
      // Predicated region
      $region37: #{tpu_custom_call.1} parent=35 // pred_check
        %p289 = pneg %p49
      $region38: #{tpu_custom_call.1} parent=35 // pred_check_branch
        %291 = sbr.rel (%p289) target = $region40
      $region39: #{tpu_custom_call.1} parent=35 // pred_region
        %p292 = scmp.lt.s32.totalorder %s22, 1
        %s293 = scalar_select %p292, %s22, 1
        %p294 = scmp.lt.s32.totalorder %s23, 0
        %s295 = scalar_select %p294, %s23, 0
        %s296 = smul.addr %s293, 4
        %s297 = sadd.s32 %s295, %s296
        %s298 = smul.addr %s297, 8
        %s299 = scalar_lea.vmem %s0, %s298
      $region40: #{tpu_custom_call.1} parent=35 // pred_fallthru
        _
    $region36: #{tpu_custom_call.1} parent=5 // pred_fallthru
      _
    %p300 = scmp.le.s32.totalorder 1, %s15
    %p301 = scmp.lt.s32.totalorder %s15, 3
    %p302 = pnand %p300, %p301
    %p303 = pneg %p302
    // Predicated region
    $region41: #{tpu_custom_call.1} parent=5 // pred_check
      _
    $region42: #{tpu_custom_call.1} parent=5 // pred_check_branch
      %305 = sbr.rel (%p302) target = $region44
    $region43: #{tpu_custom_call.1} parent=5 // pred_region
      %s306 = ssub.s32 %s15, 1
      %p307 = scmp.lt.s32.totalorder %s24, 1
      %s308 = scalar_select %p307, %s24, 1
      %p309 = scmp.lt.s32.totalorder %s25, 0
      %s310 = scalar_select %p309, %s25, 0
      %s311 = smul.addr %s308, 4
      %s312 = sadd.s32 %s310, %s311
      %s313 = smul.addr %s312, 8
      %s314 = scalar_lea.vmem %s0, %s313
      %p315 = pneg %p55
      %p316 = pneg %p52
      %p317 = pneg %p76
      %p318 = pneg %p73
      %p319 = pneg %p97
      %p320 = pneg %p94
      %p321 = pneg %p118
      %p322 = pneg %p115
      %p323 = pneg %p139
      %p324 = pneg %p136
      %s325 = smul.u32 2, %s25
      %p326 = scmp.lt.s32.totalorder %s325, 1
      %s327 = scalar_select %p326, %s325, 1
      %s328 = smul.addr %s327, 8
      %s329 = scalar_lea.vmem %s5, %s328
      %p330 = pneg %p165
      %p331 = pneg %p162
      %p332 = pneg %p193
      %p333 = pneg %p190
      %p334 = scmp.lt.s32.totalorder %s24, 1
      %s335 = scalar_select %p334, %s24, 1
      %p336 = scmp.lt.s32.totalorder %s25, 0
      %s337 = scalar_select %p336, %s25, 0
      %s338 = smul.addr %s335, 4
      %s339 = sadd.s32 %s337, %s338
      %s340 = smul.addr %s339, 8
      %s341 = scalar_lea.vmem %s6, %s340
      %p342 = pneg %p221
      %p343 = pneg %p218
      %p344 = scmp.lt.s32.totalorder %s24, 1
      %s345 = scalar_select %p344, %s24, 1
      %p346 = scmp.lt.s32.totalorder %s25, 0
      %s347 = scalar_select %p346, %s25, 0
      %s348 = smul.addr %s347, 16
      %s349 = smul.addr %s345, 16
      %s350 = sadd.s32 %s348, %s349
      %s351 = smul.addr %s350, 8
      %s352 = scalar_lea.vmem %s7, %s351
      %p353 = pneg %p249
      %p354 = pneg %p246
      %p355 = scmp.lt.s32.totalorder %s24, 1
      %s356 = scalar_select %p355, %s24, 1
      %p357 = scmp.lt.s32.totalorder %s25, 0
      %s358 = scalar_select %p357, %s25, 0
      %s359 = sadd.s32 %s358, %s356
      %s360 = scalar_lea.vmem %s8, %s359
      %p361 = scmp.lt.s32.totalorder %s24, 1
      %s362 = scalar_select %p361, %s24, 1
      %p363 = scmp.lt.s32.totalorder %s25, 0
      %s364 = scalar_select %p363, %s25, 0
      %s365 = smul.addr %s362, 4
      %s366 = sadd.s32 %s364, %s365
      %s367 = smul.addr %s366, 8
      %s368 = scalar_lea.vmem %s0, %s367
      %s369 = smul.u32 2, %s25
      %p370 = scmp.lt.s32.totalorder %s369, 1
      %s371 = scalar_select %p370, %s369, 1
      %s372 = smul.addr %s371, 8
      %s373 = scalar_lea.vmem %s5, %s372
      %s374 = smul.u32 2, %s25
      %p375 = scmp.lt.s32.totalorder %s24, 1
      %s376 = scalar_select %p375, %s24, 1
      %p377 = scmp.lt.s32.totalorder %s25, 0
      %s378 = scalar_select %p377, %s25, 0
      %s379 = smul.addr %s376, 4
      %s380 = sadd.s32 %s378, %s379
      %s381 = smul.addr %s380, 8
      %s382 = scalar_lea.vmem %s6, %s381
      %p383 = scmp.lt.s32.totalorder %s24, 1
      %s384 = scalar_select %p383, %s24, 1
      %p385 = scmp.lt.s32.totalorder %s25, 0
      %s386 = scalar_select %p385, %s25, 0
      %s387 = smul.addr %s386, 16
      %s388 = smul.addr %s384, 16
      %s389 = sadd.s32 %s387, %s388
      %s390 = smul.addr %s389, 8
      %s391 = scalar_lea.vmem %s7, %s390
      %p392 = scmp.lt.s32.totalorder %s24, 1
      %s393 = scalar_select %p392, %s24, 1
      %p394 = scmp.lt.s32.totalorder %s25, 0
      %s395 = scalar_select %p394, %s25, 0
      %s396 = sadd.s32 %s395, %s393
      %s397 = scalar_lea.vmem %s8, %s396
      %v398 = vlaneseq
      %v399 = vand.u32 %v398, 127
      %s400 = smul.u32 %s25, 16
      %v401 = vstv %s400
      %v402 = vadd.s32 %v401, %v399
      %vm403 = vcmp.lt.s32.totalorder %v402, 16
      %v404 = vld [vmem:[%s368] sm:$0xff]
      %v405 = vld [vmem:[%s368 + $0x8] sm:$0xff]
      %v406 = vld [vmem:[%s368 + $0x10] sm:$0xff]
      %v407 = vld [vmem:[%s368 + $0x18] sm:$0xff]
      %v408 = vsel %vm403, 1, 0
      %vm409 = vcmp.eq.s32.totalorder %v408, 1
      %v410 = vsel %vm409, %v404, 0.0
      %v411 = vsel %vm409, %v405, 0.0
      %v412 = vsel %vm409, %v406, 0.0
      %v413 = vsel %vm409, %v407, 0.0
      %v414 = vld [vmem:[%s1] sm:$0xff]
      %v415 = vld [vmem:[%s1 + $0x8] sm:$0xff]
      %v416 = vld [vmem:[%s1 + $0x10] sm:$0xff]
      %v417 = vld [vmem:[%s1 + $0x18] sm:$0xff]
      %v418 = vld [vmem:[%s1 + $0x20] sm:$0xff]
      %v419 = vld [vmem:[%s1 + $0x28] sm:$0xff]
      %v420 = vld [vmem:[%s1 + $0x30] sm:$0xff]
      %v421 = vld [vmem:[%s1 + $0x38] sm:$0xff]
      %v422 = vld [vmem:[%s1 + $0x40] sm:$0xff]
      %v423 = vld [vmem:[%s1 + $0x48] sm:$0xff]
      %v424 = vld [vmem:[%s1 + $0x50] sm:$0xff]
      %v425 = vld [vmem:[%s1 + $0x58] sm:$0xff]
      %v426 = vld [vmem:[%s1 + $0x60] sm:$0xff]
      %v427 = vld [vmem:[%s1 + $0x68] sm:$0xff]
      %v428 = vld [vmem:[%s1 + $0x70] sm:$0xff]
      %v429 = vld [vmem:[%s1 + $0x78] sm:$0xff]
      %v430 = vld [vmem:[%s2] sm:$0xff]
      %v431 = vld [vmem:[%s2 + $0x8] sm:$0xff]
      %v432 = vld [vmem:[%s2 + $0x10] sm:$0xff]
      %v433 = vld [vmem:[%s2 + $0x18] sm:$0xff]
      %v434 = vld [vmem:[%s3] sm:$0xff]
      %v435 = vld [vmem:[%s3 + $0x8] sm:$0xff]
      %v436 = vld [vmem:[%s3 + $0x10] sm:$0xff]
      %v437 = vld [vmem:[%s3 + $0x18] sm:$0xff]
      %v438 = vld [vmem:[%s3 + $0x20] sm:$0xff]
      %v439 = vld [vmem:[%s3 + $0x28] sm:$0xff]
      %v440 = vld [vmem:[%s3 + $0x30] sm:$0xff]
      %v441 = vld [vmem:[%s3 + $0x38] sm:$0xff]
      %v442 = vld [vmem:[%s3 + $0x40] sm:$0xff]
      %v443 = vld [vmem:[%s3 + $0x48] sm:$0xff]
      %v444 = vld [vmem:[%s3 + $0x50] sm:$0xff]
      %v445 = vld [vmem:[%s3 + $0x58] sm:$0xff]
      %v446 = vld [vmem:[%s3 + $0x60] sm:$0xff]
      %v447 = vld [vmem:[%s3 + $0x68] sm:$0xff]
      %v448 = vld [vmem:[%s3 + $0x70] sm:$0xff]
      %v449 = vld [vmem:[%s3 + $0x78] sm:$0xff]
      %v450 = vld [vmem:[%s4] sm:$0xff]
      %v451 = vld [vmem:[%s4 + $0x8] sm:$0xff]
      %v452 = vld [vmem:[%s4 + $0x10] sm:$0xff]
      %v453 = vld [vmem:[%s4 + $0x18] sm:$0xff]
      %v454 = vld [vmem:[%s4 + $0x20] sm:$0xff]
      %v455 = vld [vmem:[%s4 + $0x28] sm:$0xff]
      %v456 = vld [vmem:[%s4 + $0x30] sm:$0xff]
      %v457 = vld [vmem:[%s4 + $0x38] sm:$0xff]
      %v458 = vld [vmem:[%s4 + $0x40] sm:$0xff]
      %v459 = vld [vmem:[%s4 + $0x48] sm:$0xff]
      %v460 = vld [vmem:[%s4 + $0x50] sm:$0xff]
      %v461 = vld [vmem:[%s4 + $0x58] sm:$0xff]
      %v462 = vld [vmem:[%s4 + $0x60] sm:$0xff]
      %v463 = vld [vmem:[%s4 + $0x68] sm:$0xff]
      %v464 = vld [vmem:[%s4 + $0x70] sm:$0xff]
      %v465 = vld [vmem:[%s4 + $0x78] sm:$0xff]
      %v466 = vld [vmem:[%s373] sm:$0xff]
      %v467 = vld [vmem:[%s373 + $0x8] sm:$0xff]
      %vm468 = vcmask 261120
      %v470 = vsel %vm468, %v414, 0
      %v473 = vsel %vm468, %v415, 0
      %v476 = vsel %vm468, %v416, 0
      %v479 = vsel %vm468, %v417, 0
      %v482 = vsel %vm468, %v418, 0
      %v485 = vsel %vm468, %v419, 0
      %v488 = vsel %vm468, %v420, 0
      %v491 = vsel %vm468, %v421, 0
      %v494 = vsel %vm468, %v422, 0
      %v497 = vsel %vm468, %v423, 0
      %v500 = vsel %vm468, %v424, 0
      %v503 = vsel %vm468, %v425, 0
      %v506 = vsel %vm468, %v426, 0
      %v509 = vsel %vm468, %v427, 0
      %v512 = vsel %vm468, %v428, 0
      %v515 = vsel %vm468, %v429, 0
      %517 = vmatpush.msra.mxu0 0.0
      %518 = vmatpush.msra.mxu0 0.0
      %519 = vmatpush.msra.mxu0 0.0
      %520 = vmatpush.msra.mxu0 0.0
      %521 = vmatpush.msra.mxu0 0.0
      %522 = vmatpush.msra.mxu0 0.0
      %523 = vmatpush.msra.mxu0 0.0
      %524 = vmatpush.msra.mxu0 0.0
      %525 = vmatpush.msra.mxu0 0.0
      %526 = vmatpush.msra.mxu0 0.0
      %527 = vmatpush.msra.mxu0 0.0
      %528 = vmatpush.msra.mxu0 0.0
      %529 = vmatpush.msra.mxu0 %v413
      %530 = vmatpush.msra.mxu0 %v412
      %531 = vmatpush.msra.mxu0 %v411
      %532 = vmatpush.msra.mxu0 %v410
      %533 = vmatmul.f32.gmra.mxu0 %v470
      %v534 = vpop.f32.mrf.mxu0
      %v535 = vadd.f32 0.0, %v534
      %536 = vmatmul.f32.gmra.mxu0 %v473
      %v537 = vpop.f32.mrf.mxu0
      %v538 = vadd.f32 0.0, %v537
      %539 = vmatmul.f32.gmra.mxu0 %v476
      %v540 = vpop.f32.mrf.mxu0
      %v541 = vadd.f32 0.0, %v540
      %542 = vmatmul.f32.gmra.mxu0 %v479
      %v543 = vpop.f32.mrf.mxu0
      %v544 = vadd.f32 0.0, %v543
      %545 = vmatmul.f32.gmra.mxu0 %v482
      %v546 = vpop.f32.mrf.mxu0
      %v547 = vadd.f32 0.0, %v546
      %548 = vmatmul.f32.gmra.mxu0 %v485
      %v549 = vpop.f32.mrf.mxu0
      %v550 = vadd.f32 0.0, %v549
      %551 = vmatmul.f32.gmra.mxu0 %v488
      %v552 = vpop.f32.mrf.mxu0
      %v553 = vadd.f32 0.0, %v552
      %554 = vmatmul.f32.gmra.mxu0 %v491
      %v555 = vpop.f32.mrf.mxu0
      %v556 = vadd.f32 0.0, %v555
      %557 = vmatmul.f32.gmra.mxu0 %v494
      %v558 = vpop.f32.mrf.mxu0
      %v559 = vadd.f32 0.0, %v558
      %560 = vmatmul.f32.gmra.mxu0 %v497
      %v561 = vpop.f32.mrf.mxu0
      %v562 = vadd.f32 0.0, %v561
      %563 = vmatmul.f32.gmra.mxu0 %v500
      %v564 = vpop.f32.mrf.mxu0
      %v565 = vadd.f32 0.0, %v564
      %566 = vmatmul.f32.gmra.mxu0 %v503
      %v567 = vpop.f32.mrf.mxu0
      %v568 = vadd.f32 0.0, %v567
      %569 = vmatmul.f32.gmra.mxu0 %v506
      %v570 = vpop.f32.mrf.mxu0
      %v571 = vadd.f32 0.0, %v570
      %572 = vmatmul.f32.gmra.mxu0 %v509
      %v573 = vpop.f32.mrf.mxu0
      %v574 = vadd.f32 0.0, %v573
      %575 = vmatmul.f32.gmra.mxu0 %v512
      %v576 = vpop.f32.mrf.mxu0
      %v577 = vadd.f32 0.0, %v576
      %578 = vmatmul.f32.gmra.mxu0 %v515
      %v579 = vpop.f32.mrf.mxu0
      %v580 = vadd.f32 0.0, %v579
      %581 = vdwg.mxu0
      %583 = vset.pattern.permute.xlu0 0
      %584 = vperm.xlu0 %583, %v434
      %v585 = vpop.permute.xlu0 %584
      %588 = vset.pattern.permute.xlu0 0
      %589 = vperm.xlu0 %588, %v435
      %v590 = vpop.permute.xlu0 %589
      %593 = vset.pattern.permute.xlu0 0
      %594 = vperm.xlu0 %593, %v436
      %v595 = vpop.permute.xlu0 %594
      %598 = vset.pattern.permute.xlu0 0
      %599 = vperm.xlu0 %598, %v437
      %v600 = vpop.permute.xlu0 %599
      %603 = vset.pattern.permute.xlu0 0
      %604 = vperm.xlu0 %603, %v438
      %v605 = vpop.permute.xlu0 %604
      %608 = vset.pattern.permute.xlu0 0
      %609 = vperm.xlu0 %608, %v439
      %v610 = vpop.permute.xlu0 %609
      %613 = vset.pattern.permute.xlu0 0
      %614 = vperm.xlu0 %613, %v440
      %v615 = vpop.permute.xlu0 %614
      %618 = vset.pattern.permute.xlu0 0
      %619 = vperm.xlu0 %618, %v441
      %v620 = vpop.permute.xlu0 %619
      %623 = vset.pattern.permute.xlu0 0
      %624 = vperm.xlu0 %623, %v442
      %v625 = vpop.permute.xlu0 %624
      %628 = vset.pattern.permute.xlu0 0
      %629 = vperm.xlu0 %628, %v443
      %v630 = vpop.permute.xlu0 %629
      %633 = vset.pattern.permute.xlu0 0
      %634 = vperm.xlu0 %633, %v444
      %v635 = vpop.permute.xlu0 %634
      %638 = vset.pattern.permute.xlu0 0
      %639 = vperm.xlu0 %638, %v445
      %v640 = vpop.permute.xlu0 %639
      %643 = vset.pattern.permute.xlu0 0
      %644 = vperm.xlu0 %643, %v446
      %v645 = vpop.permute.xlu0 %644
      %648 = vset.pattern.permute.xlu0 0
      %649 = vperm.xlu0 %648, %v447
      %v650 = vpop.permute.xlu0 %649
      %653 = vset.pattern.permute.xlu0 0
      %654 = vperm.xlu0 %653, %v448
      %v655 = vpop.permute.xlu0 %654
      %658 = vset.pattern.permute.xlu0 0
      %659 = vperm.xlu0 %658, %v449
      %v660 = vpop.permute.xlu0 %659
      %v662 = vsub.f32 %v535, %v585
      %v663 = vsub.f32 %v538, %v590
      %v664 = vsub.f32 %v541, %v595
      %v665 = vsub.f32 %v544, %v600
      %v666 = vsub.f32 %v547, %v605
      %v667 = vsub.f32 %v550, %v610
      %v668 = vsub.f32 %v553, %v615
      %v669 = vsub.f32 %v556, %v620
      %v670 = vsub.f32 %v559, %v625
      %v671 = vsub.f32 %v562, %v630
      %v672 = vsub.f32 %v565, %v635
      %v673 = vsub.f32 %v568, %v640
      %v674 = vsub.f32 %v571, %v645
      %v675 = vsub.f32 %v574, %v650
      %v676 = vsub.f32 %v577, %v655
      %v677 = vsub.f32 %v580, %v660
      %vm678 = vcmask 130048
      %v679 = vsel %vm678, %v662, -inf
      %v680 = vsel %vm678, %v663, -inf
      %v681 = vsel %vm678, %v664, -inf
      %v682 = vsel %vm678, %v665, -inf
      %v683 = vsel %vm678, %v666, -inf
      %v684 = vmax.f32 %v679, %v683
      %v685 = vsel %vm678, %v667, -inf
      %v686 = vmax.f32 %v680, %v685
      %v687 = vsel %vm678, %v668, -inf
      %v688 = vmax.f32 %v681, %v687
      %v689 = vsel %vm678, %v669, -inf
      %v690 = vmax.f32 %v682, %v689
      %v691 = vsel %vm678, %v670, -inf
      %v692 = vmax.f32 %v684, %v691
      %v693 = vsel %vm678, %v671, -inf
      %v694 = vmax.f32 %v686, %v693
      %v695 = vsel %vm678, %v672, -inf
      %v696 = vmax.f32 %v688, %v695
      %v697 = vsel %vm678, %v673, -inf
      %v698 = vmax.f32 %v690, %v697
      %v699 = vsel %vm678, %v674, -inf
      %v700 = vmax.f32 %v692, %v699
      %v701 = vsel %vm678, %v675, -inf
      %v702 = vmax.f32 %v694, %v701
      %v703 = vsel %vm678, %v676, -inf
      %v704 = vmax.f32 %v696, %v703
      %v705 = vsel %vm678, %v677, -inf
      %v706 = vmax.f32 %v698, %v705
      %v707 = vmax.f32 %v700, %v702
      %v708 = vmax.f32 %v704, %v706
      %v709 = vmax.f32 %v707, %v708
      %v710 = vrot.slane %v709, 4
      %v711 = vmax.f32 %v709, %v710
      %v712 = vrot.slane %v711, 2
      %v713 = vmax.f32 %v711, %v712
      %v714 = vrot.slane %v713, 1
      %v715 = vmax.f32 %v713, %v714
      %vm716 = vcmp.ge.f32.partialorder %v662, %v715
      %vm717 = vcmp.ge.f32.partialorder %v663, %v715
      %vm718 = vcmp.ge.f32.partialorder %v664, %v715
      %vm719 = vcmp.ge.f32.partialorder %v665, %v715
      %vm720 = vcmp.ge.f32.partialorder %v666, %v715
      %vm721 = vcmp.ge.f32.partialorder %v667, %v715
      %vm722 = vcmp.ge.f32.partialorder %v668, %v715
      %vm723 = vcmp.ge.f32.partialorder %v669, %v715
      %vm724 = vcmp.ge.f32.partialorder %v670, %v715
      %vm725 = vcmp.ge.f32.partialorder %v671, %v715
      %vm726 = vcmp.ge.f32.partialorder %v672, %v715
      %vm727 = vcmp.ge.f32.partialorder %v673, %v715
      %vm728 = vcmp.ge.f32.partialorder %v674, %v715
      %vm729 = vcmp.ge.f32.partialorder %v675, %v715
      %vm730 = vcmp.ge.f32.partialorder %v676, %v715
      %vm731 = vcmp.ge.f32.partialorder %v677, %v715
      %732 = vset.pattern.permute.xlu0 0
      %733 = vperm.xlu0 %732, %v450
      %v734 = vpop.permute.xlu0 %733
      %735 = vset.pattern.permute.xlu0 0
      %736 = vperm.xlu0 %735, %v451
      %v737 = vpop.permute.xlu0 %736
      %738 = vset.pattern.permute.xlu0 0
      %739 = vperm.xlu0 %738, %v452
      %v740 = vpop.permute.xlu0 %739
      %741 = vset.pattern.permute.xlu0 0
      %742 = vperm.xlu0 %741, %v453
      %v743 = vpop.permute.xlu0 %742
      %744 = vset.pattern.permute.xlu0 0
      %745 = vperm.xlu0 %744, %v454
      %v746 = vpop.permute.xlu0 %745
      %747 = vset.pattern.permute.xlu0 0
      %748 = vperm.xlu0 %747, %v455
      %v749 = vpop.permute.xlu0 %748
      %750 = vset.pattern.permute.xlu0 0
      %751 = vperm.xlu0 %750, %v456
      %v752 = vpop.permute.xlu0 %751
      %753 = vset.pattern.permute.xlu0 0
      %754 = vperm.xlu0 %753, %v457
      %v755 = vpop.permute.xlu0 %754
      %756 = vset.pattern.permute.xlu0 0
      %757 = vperm.xlu0 %756, %v458
      %v758 = vpop.permute.xlu0 %757
      %759 = vset.pattern.permute.xlu0 0
      %760 = vperm.xlu0 %759, %v459
      %v761 = vpop.permute.xlu0 %760
      %762 = vset.pattern.permute.xlu0 0
      %763 = vperm.xlu0 %762, %v460
      %v764 = vpop.permute.xlu0 %763
      %765 = vset.pattern.permute.xlu0 0
      %766 = vperm.xlu0 %765, %v461
      %v767 = vpop.permute.xlu0 %766
      %768 = vset.pattern.permute.xlu0 0
      %769 = vperm.xlu0 %768, %v462
      %v770 = vpop.permute.xlu0 %769
      %771 = vset.pattern.permute.xlu0 0
      %772 = vperm.xlu0 %771, %v463
      %v773 = vpop.permute.xlu0 %772
      %774 = vset.pattern.permute.xlu0 0
      %775 = vperm.xlu0 %774, %v464
      %v776 = vpop.permute.xlu0 %775
      %777 = vset.pattern.permute.xlu0 0
      %778 = vperm.xlu0 %777, %v465
      %v779 = vpop.permute.xlu0 %778
      %v780 = vsel %vm716, %v734, 128
      %v781 = vsel %vm717, %v737, 128
      %v782 = vsel %vm718, %v740, 128
      %v783 = vsel %vm719, %v743, 128
      %v784 = vsel %vm720, %v746, 128
      %v785 = vsel %vm721, %v749, 128
      %v786 = vsel %vm722, %v752, 128
      %v787 = vsel %vm723, %v755, 128
      %v788 = vsel %vm724, %v758, 128
      %v789 = vsel %vm725, %v761, 128
      %v790 = vsel %vm726, %v764, 128
      %v791 = vsel %vm727, %v767, 128
      %v792 = vsel %vm728, %v770, 128
      %v793 = vsel %vm729, %v773, 128
      %v794 = vsel %vm730, %v776, 128
      %v795 = vsel %vm731, %v779, 128
      %v796 = vsel %vm678, %v780, 2147483647
      %v797 = vsel %vm678, %v781, 2147483647
      %v798 = vsel %vm678, %v782, 2147483647
      %v799 = vsel %vm678, %v783, 2147483647
      %v800 = vsel %vm678, %v784, 2147483647
      %vm801 = vcmp.lt.s32.totalorder %v796, %v800
      %v802 = vsel %vm801, %v796, %v800
      %v803 = vsel %vm678, %v785, 2147483647
      %vm804 = vcmp.lt.s32.totalorder %v797, %v803
      %v805 = vsel %vm804, %v797, %v803
      %v806 = vsel %vm678, %v786, 2147483647
      %vm807 = vcmp.lt.s32.totalorder %v798, %v806
      %v808 = vsel %vm807, %v798, %v806
      %v809 = vsel %vm678, %v787, 2147483647
      %vm810 = vcmp.lt.s32.totalorder %v799, %v809
      %v811 = vsel %vm810, %v799, %v809
      %v812 = vsel %vm678, %v788, 2147483647
      %vm813 = vcmp.lt.s32.totalorder %v802, %v812
      %v814 = vsel %vm813, %v802, %v812
      %v815 = vsel %vm678, %v789, 2147483647
      %vm816 = vcmp.lt.s32.totalorder %v805, %v815
      %v817 = vsel %vm816, %v805, %v815
      %v818 = vsel %vm678, %v790, 2147483647
      %vm819 = vcmp.lt.s32.totalorder %v808, %v818
      %v820 = vsel %vm819, %v808, %v818
      %v821 = vsel %vm678, %v791, 2147483647
      %vm822 = vcmp.lt.s32.totalorder %v811, %v821
      %v823 = vsel %vm822, %v811, %v821
      %v824 = vsel %vm678, %v792, 2147483647
      %vm825 = vcmp.lt.s32.totalorder %v814, %v824
      %v826 = vsel %vm825, %v814, %v824
      %v827 = vsel %vm678, %v793, 2147483647
      %vm828 = vcmp.lt.s32.totalorder %v817, %v827
      %v829 = vsel %vm828, %v817, %v827
      %v830 = vsel %vm678, %v794, 2147483647
      %vm831 = vcmp.lt.s32.totalorder %v820, %v830
      %v832 = vsel %vm831, %v820, %v830
      %v833 = vsel %vm678, %v795, 2147483647
      %vm834 = vcmp.lt.s32.totalorder %v823, %v833
      %v835 = vsel %vm834, %v823, %v833
      %vm836 = vcmp.lt.s32.totalorder %v826, %v829
      %v837 = vsel %vm836, %v826, %v829
      %vm838 = vcmp.lt.s32.totalorder %v832, %v835
      %v839 = vsel %vm838, %v832, %v835
      %vm840 = vcmp.lt.s32.totalorder %v837, %v839
      %v841 = vsel %vm840, %v837, %v839
      %v842 = vrot.slane %v841, 4
      %vm843 = vcmp.lt.s32.totalorder %v841, %v842
      %v844 = vsel %vm843, %v841, %v842
      %v845 = vrot.slane %v844, 2
      %vm846 = vcmp.lt.s32.totalorder %v844, %v845
      %v847 = vsel %vm846, %v844, %v845
      %v848 = vrot.slane %v847, 1
      %vm849 = vcmp.lt.s32.totalorder %v847, %v848
      %v850 = vsel %vm849, %v847, %v848
      %vm851 = vcmp.eq.s32.totalorder %v734, %v850
      %vm852 = vcmp.eq.s32.totalorder %v737, %v850
      %vm853 = vcmp.eq.s32.totalorder %v740, %v850
      %vm854 = vcmp.eq.s32.totalorder %v743, %v850
      %vm855 = vcmp.eq.s32.totalorder %v746, %v850
      %vm856 = vcmp.eq.s32.totalorder %v749, %v850
      %vm857 = vcmp.eq.s32.totalorder %v752, %v850
      %vm858 = vcmp.eq.s32.totalorder %v755, %v850
      %vm859 = vcmp.eq.s32.totalorder %v758, %v850
      %vm860 = vcmp.eq.s32.totalorder %v761, %v850
      %vm861 = vcmp.eq.s32.totalorder %v764, %v850
      %vm862 = vcmp.eq.s32.totalorder %v767, %v850
      %vm863 = vcmp.eq.s32.totalorder %v770, %v850
      %vm864 = vcmp.eq.s32.totalorder %v773, %v850
      %vm865 = vcmp.eq.s32.totalorder %v776, %v850
      %vm866 = vcmp.eq.s32.totalorder %v779, %v850
      %v867 = vsel %vm851, 1, 0
      %v868 = vsel %vm852, 1, 0
      %v869 = vsel %vm853, 1, 0
      %v870 = vsel %vm854, 1, 0
      %v871 = vsel %vm855, 1, 0
      %v872 = vsel %vm856, 1, 0
      %v873 = vsel %vm857, 1, 0
      %v874 = vsel %vm858, 1, 0
      %v875 = vsel %vm859, 1, 0
      %v876 = vsel %vm860, 1, 0
      %v877 = vsel %vm861, 1, 0
      %v878 = vsel %vm862, 1, 0
      %v879 = vsel %vm863, 1, 0
      %v880 = vsel %vm864, 1, 0
      %v881 = vsel %vm865, 1, 0
      %v882 = vsel %vm866, 1, 0
      %v883 = vcvt.s32.f32 %v867
      %v884 = vcvt.s32.f32 %v868
      %v885 = vcvt.s32.f32 %v869
      %v886 = vcvt.s32.f32 %v870
      %v887 = vcvt.s32.f32 %v871
      %v888 = vcvt.s32.f32 %v872
      %v889 = vcvt.s32.f32 %v873
      %v890 = vcvt.s32.f32 %v874
      %v891 = vcvt.s32.f32 %v875
      %v892 = vcvt.s32.f32 %v876
      %v893 = vcvt.s32.f32 %v877
      %v894 = vcvt.s32.f32 %v878
      %v895 = vcvt.s32.f32 %v879
      %v896 = vcvt.s32.f32 %v880
      %v897 = vcvt.s32.f32 %v881
      %v898 = vcvt.s32.f32 %v882
      %899 = vmatpush.msra.mxu0 %v898
      %900 = vmatpush.msra.mxu0 %v897
      %901 = vmatpush.msra.mxu0 %v896
      %902 = vmatpush.msra.mxu0 %v895
      %903 = vmatpush.msra.mxu0 %v894
      %904 = vmatpush.msra.mxu0 %v893
      %905 = vmatpush.msra.mxu0 %v892
      %906 = vmatpush.msra.mxu0 %v891
      %907 = vmatpush.msra.mxu0 %v890
      %908 = vmatpush.msra.mxu0 %v889
      %909 = vmatpush.msra.mxu0 %v888
      %910 = vmatpush.msra.mxu0 %v887
      %911 = vmatpush.msra.mxu0 %v886
      %912 = vmatpush.msra.mxu0 %v885
      %913 = vmatpush.msra.mxu0 %v884
      %914 = vmatpush.msra.mxu0 %v883
      %915 = vmatmul.f32.gmra.mxu0 %v430
      %v916 = vpop.f32.mrf.mxu0
      %v917 = vadd.f32 0.0, %v916
      %918 = vmatmul.f32.gmra.mxu0 %v431
      %v919 = vpop.f32.mrf.mxu0
      %v920 = vadd.f32 0.0, %v919
      %921 = vmatmul.f32.gmra.mxu0 %v432
      %v922 = vpop.f32.mrf.mxu0
      %v923 = vadd.f32 0.0, %v922
      %924 = vmatmul.f32.gmra.mxu0 %v433
      %v925 = vpop.f32.mrf.mxu0
      %v926 = vadd.f32 0.0, %v925
      %927 = vdwg.mxu0
      %928 = vst.msk [vmem:[%s382] sm:$0xff] %vm678, %v917
      %929 = vst.msk [vmem:[%s382 + $0x8] sm:$0xff] %vm678, %v920
      %930 = vst.msk [vmem:[%s382 + $0x10] sm:$0xff] %vm678, %v923
      %931 = vst.msk [vmem:[%s382 + $0x18] sm:$0xff] %vm678, %v926
      %v933 = vsel %vm678, %v883, 0
      %v936 = vsel %vm678, %v884, 0
      %v939 = vsel %vm678, %v885, 0
      %v942 = vsel %vm678, %v886, 0
      %v945 = vsel %vm678, %v887, 0
      %v948 = vsel %vm678, %v888, 0
      %v951 = vsel %vm678, %v889, 0
      %v954 = vsel %vm678, %v890, 0
      %v957 = vsel %vm678, %v891, 0
      %v960 = vsel %vm678, %v892, 0
      %v963 = vsel %vm678, %v893, 0
      %v966 = vsel %vm678, %v894, 0
      %v969 = vsel %vm678, %v895, 0
      %v972 = vsel %vm678, %v896, 0
      %v975 = vsel %vm678, %v897, 0
      %v978 = vsel %vm678, %v898, 0
      %980 = vmatpush.msra.mxu0 0.0
      %981 = vmatpush.msra.mxu0 0.0
      %982 = vmatpush.msra.mxu0 0.0
      %983 = vmatpush.msra.mxu0 0.0
      %984 = vmatpush.msra.mxu0 0.0
      %985 = vmatpush.msra.mxu0 0.0
      %986 = vmatpush.msra.mxu0 0.0
      %987 = vmatpush.msra.mxu0 0.0
      %988 = vmatpush.msra.mxu0 0.0
      %989 = vmatpush.msra.mxu0 0.0
      %990 = vmatpush.msra.mxu0 0.0
      %991 = vmatpush.msra.mxu0 0.0
      %992 = vmatpush.msra.mxu0 0.0
      %993 = vmatpush.msra.mxu0 0.0
      %994 = vmatpush.msra.mxu0 %v467
      %995 = vmatpush.msra.mxu0 %v466
      %996 = vmatmul.f32.gmra.mxu0 %v933
      %v997 = vpop.f32.mrf.mxu0
      %v998 = vadd.f32 0.0, %v997
      %999 = vmatmul.f32.gmra.mxu0 %v936
      %v1000 = vpop.f32.mrf.mxu0
      %v1001 = vadd.f32 0.0, %v1000
      %1002 = vmatmul.f32.gmra.mxu0 %v939
      %v1003 = vpop.f32.mrf.mxu0
      %v1004 = vadd.f32 0.0, %v1003
      %1005 = vmatmul.f32.gmra.mxu0 %v942
      %v1006 = vpop.f32.mrf.mxu0
      %v1007 = vadd.f32 0.0, %v1006
      %1008 = vmatmul.f32.gmra.mxu0 %v945
      %v1009 = vpop.f32.mrf.mxu0
      %v1010 = vadd.f32 0.0, %v1009
      %1011 = vmatmul.f32.gmra.mxu0 %v948
      %v1012 = vpop.f32.mrf.mxu0
      %v1013 = vadd.f32 0.0, %v1012
      %1014 = vmatmul.f32.gmra.mxu0 %v951
      %v1015 = vpop.f32.mrf.mxu0
      %v1016 = vadd.f32 0.0, %v1015
      %1017 = vmatmul.f32.gmra.mxu0 %v954
      %v1018 = vpop.f32.mrf.mxu0
      %v1019 = vadd.f32 0.0, %v1018
      %1020 = vmatmul.f32.gmra.mxu0 %v957
      %v1021 = vpop.f32.mrf.mxu0
      %v1022 = vadd.f32 0.0, %v1021
      %1023 = vmatmul.f32.gmra.mxu0 %v960
      %v1024 = vpop.f32.mrf.mxu0
      %v1025 = vadd.f32 0.0, %v1024
      %1026 = vmatmul.f32.gmra.mxu0 %v963
      %v1027 = vpop.f32.mrf.mxu0
      %v1028 = vadd.f32 0.0, %v1027
      %1029 = vmatmul.f32.gmra.mxu0 %v966
      %v1030 = vpop.f32.mrf.mxu0
      %v1031 = vadd.f32 0.0, %v1030
      %1032 = vmatmul.f32.gmra.mxu0 %v969
      %v1033 = vpop.f32.mrf.mxu0
      %v1034 = vadd.f32 0.0, %v1033
      %1035 = vmatmul.f32.gmra.mxu0 %v972
      %v1036 = vpop.f32.mrf.mxu0
      %v1037 = vadd.f32 0.0, %v1036
      %1038 = vmatmul.f32.gmra.mxu0 %v975
      %v1039 = vpop.f32.mrf.mxu0
      %v1040 = vadd.f32 0.0, %v1039
      %1041 = vmatmul.f32.gmra.mxu0 %v978
      %v1042 = vpop.f32.mrf.mxu0
      %v1043 = vadd.f32 0.0, %v1042
      %1044 = vdwg.mxu0
      %vm1045 = vcmask 7168
      %1046 = vst.msk [vmem:[%s391] sm:$0xff] %vm1045, %v998
      %1047 = vst.msk [vmem:[%s391 + $0x8] sm:$0xff] %vm1045, %v1001
      %1048 = vst.msk [vmem:[%s391 + $0x10] sm:$0xff] %vm1045, %v1004
      %1049 = vst.msk [vmem:[%s391 + $0x18] sm:$0xff] %vm1045, %v1007
      %1050 = vst.msk [vmem:[%s391 + $0x20] sm:$0xff] %vm1045, %v1010
      %1051 = vst.msk [vmem:[%s391 + $0x28] sm:$0xff] %vm1045, %v1013
      %1052 = vst.msk [vmem:[%s391 + $0x30] sm:$0xff] %vm1045, %v1016
      %1053 = vst.msk [vmem:[%s391 + $0x38] sm:$0xff] %vm1045, %v1019
      %1054 = vst.msk [vmem:[%s391 + $0x40] sm:$0xff] %vm1045, %v1022
      %1055 = vst.msk [vmem:[%s391 + $0x48] sm:$0xff] %vm1045, %v1025
      %1056 = vst.msk [vmem:[%s391 + $0x50] sm:$0xff] %vm1045, %v1028
      %1057 = vst.msk [vmem:[%s391 + $0x58] sm:$0xff] %vm1045, %v1031
      %1058 = vst.msk [vmem:[%s391 + $0x60] sm:$0xff] %vm1045, %v1034
      %1059 = vst.msk [vmem:[%s391 + $0x68] sm:$0xff] %vm1045, %v1037
      %1060 = vst.msk [vmem:[%s391 + $0x70] sm:$0xff] %vm1045, %v1040
      %1061 = vst.msk [vmem:[%s391 + $0x78] sm:$0xff] %vm1045, %v1043
      %v1062 = vsub.f32 %v410, %v917
      %v1063 = vsub.f32 %v411, %v920
      %v1064 = vsub.f32 %v412, %v923
      %v1065 = vsub.f32 %v413, %v926
      %v1066 = vmul.f32 %v1062, %v1062
      %v1067 = vmul.f32 %v1063, %v1063
      %v1068 = vmul.f32 %v1064, %v1064
      %v1069 = vmul.f32 %v1065, %v1065
      %v1071 = vsel %vm678, %v1066, 0
      %v1074 = vsel %vm678, %v1067, 0
      %v1077 = vsel %vm678, %v1068, 0
      %v1080 = vsel %vm678, %v1069, 0
      %1082 = vmatpush.msra.mxu0 0.0
      %1083 = vmatpush.msra.mxu0 0.0
      %1084 = vmatpush.msra.mxu0 0.0
      %1085 = vmatpush.msra.mxu0 0.0
      %1086 = vmatpush.msra.mxu0 0.0
      %1087 = vmatpush.msra.mxu0 0.0
      %1088 = vmatpush.msra.mxu0 0.0
      %1089 = vmatpush.msra.mxu0 0.0
      %1090 = vmatpush.msra.mxu0 0.0
      %1091 = vmatpush.msra.mxu0 0.0
      %1092 = vmatpush.msra.mxu0 0.0
      %1093 = vmatpush.msra.mxu0 0.0
      %1094 = vmatpush.msra.mxu0 0.0
      %1095 = vmatpush.msra.mxu0 0.0
      %1096 = vmatpush.msra.mxu0 %v467
      %1097 = vmatpush.msra.mxu0 %v466
      %1098 = vmatmul.f32.gmra.mxu0 %v1071
      %v1099 = vpop.f32.mrf.mxu0
      %v1100 = vadd.f32 0.0, %v1099
      %1101 = vmatmul.f32.gmra.mxu0 %v1074
      %v1102 = vpop.f32.mrf.mxu0
      %v1103 = vadd.f32 0.0, %v1102
      %1104 = vmatmul.f32.gmra.mxu0 %v1077
      %v1105 = vpop.f32.mrf.mxu0
      %v1106 = vadd.f32 0.0, %v1105
      %1107 = vmatmul.f32.gmra.mxu0 %v1080
      %v1108 = vpop.f32.mrf.mxu0
      %v1109 = vadd.f32 0.0, %v1108
      %1110 = vdwg.mxu0
      %v1111 = vsel %vm1045, %v1100, 0.0
      %v1112 = vsel %vm1045, %v1103, 0.0
      %v1113 = vadd.f32 %v1111, %v1112
      %v1114 = vsel %vm1045, %v1106, 0.0
      %v1115 = vadd.f32 %v1113, %v1114
      %v1116 = vsel %vm1045, %v1109, 0.0
      %v1117 = vadd.f32 %v1115, %v1116
      %1118 = vadd.xlane.f32.xlu0 %v1117
      %v1119 = vpop.xlane.xlu0 %1118
      %v1120 = vrot.slane %v1119, 4
      %v1121 = vadd.f32 %v1119, %v1120
      %v1122 = vrot.slane %v1121, 2
      %v1123 = vadd.f32 %v1121, %v1122
      %v1124 = vrot.slane %v1123, 1
      %v1125 = vadd.f32 %v1123, %v1124
      %s1126 = vtos %v1125
      %v1127 = vstv %s1126
      %vm1128 = vcmask 0
      %1129 = vst.msk [vmem:[%s397] sm:$0x1] %vm1128, %v1127
      %p1130 = scmp.lt.s32.totalorder %s24, 1
      %s1131 = scalar_select %p1130, %s24, 1
      %p1132 = scmp.lt.s32.totalorder %s25, 0
      %s1133 = scalar_select %p1132, %s25, 0
      %s1134 = smul.addr %s1131, 4
      %s1135 = sadd.s32 %s1133, %s1134
      %s1136 = smul.addr %s1135, 8
      %s1137 = scalar_lea.vmem %s6, %s1136
      %p1138 = scmp.lt.s32.totalorder %s24, 1
      %s1139 = scalar_select %p1138, %s24, 1
      %p1140 = scmp.lt.s32.totalorder %s25, 0
      %s1141 = scalar_select %p1140, %s25, 0
      %s1142 = smul.addr %s1141, 16
      %s1143 = smul.addr %s1139, 16
      %s1144 = sadd.s32 %s1142, %s1143
      %s1145 = smul.addr %s1144, 8
      %s1146 = scalar_lea.vmem %s7, %s1145
      %p1147 = scmp.lt.s32.totalorder %s24, 1
      %s1148 = scalar_select %p1147, %s24, 1
      %p1149 = scmp.lt.s32.totalorder %s25, 0
      %s1150 = scalar_select %p1149, %s25, 0
      %s1151 = sadd.s32 %s1150, %s1148
      %s1152 = scalar_lea.vmem %s8, %s1151
      // Predicated region
      $region45: #{tpu_custom_call.1} parent=43 // pred_check
        %p1153 = pneg %p190
      $region46: #{tpu_custom_call.1} parent=43 // pred_check_branch
        %1155 = sbr.rel (%p1153) target = $region48
      $region47: #{tpu_custom_call.1} parent=43 // pred_region
        _
      $region48: #{tpu_custom_call.1} parent=43 // pred_fallthru
        _
      // Predicated region
      $region49: #{tpu_custom_call.1} parent=43 // pred_check
        %p1156 = pneg %p218
      $region50: #{tpu_custom_call.1} parent=43 // pred_check_branch
        %1158 = sbr.rel (%p1156) target = $region52
      $region51: #{tpu_custom_call.1} parent=43 // pred_region
        _
      $region52: #{tpu_custom_call.1} parent=43 // pred_fallthru
        _
      // Predicated region
      $region53: #{tpu_custom_call.1} parent=43 // pred_check
        %p1159 = pneg %p246
      $region54: #{tpu_custom_call.1} parent=43 // pred_check_branch
        %1161 = sbr.rel (%p1159) target = $region56
      $region55: #{tpu_custom_call.1} parent=43 // pred_region
        _
      $region56: #{tpu_custom_call.1} parent=43 // pred_fallthru
        _
    $region44: #{tpu_custom_call.1} parent=5 // pred_fallthru
      _
    %p1162 = scmp.le.s32.totalorder 2, %s15
    // Predicated region
    $region57: #{tpu_custom_call.1} parent=5 // pred_check
      %p1163 = pneg %p1162
    $region58: #{tpu_custom_call.1} parent=5 // pred_check_branch
      %1165 = sbr.rel (%p1163) target = $region60
    $region59: #{tpu_custom_call.1} parent=5 // pred_region
      %s1166 = ssub.s32 %s15, 2
      // Predicated region
      $region61: #{tpu_custom_call.1} parent=59 // pred_check
        %p1167 = pneg %p196
      $region62: #{tpu_custom_call.1} parent=59 // pred_check_branch
        %1169 = sbr.rel (%p1167) target = $region64
      $region63: #{tpu_custom_call.1} parent=59 // pred_region
        %p1170 = scmp.lt.s32.totalorder %s26, 1
        %s1171 = scalar_select %p1170, %s26, 1
        %p1172 = scmp.lt.s32.totalorder %s27, 0
        %s1173 = scalar_select %p1172, %s27, 0
        %s1174 = smul.addr %s1171, 4
        %s1175 = sadd.s32 %s1173, %s1174
        %s1176 = smul.addr %s1175, 8
        %s1177 = scalar_lea.vmem %s6, %s1176
      $region64: #{tpu_custom_call.1} parent=59 // pred_fallthru
        _
      // Predicated region
      $region65: #{tpu_custom_call.1} parent=59 // pred_check
        %p1178 = pneg %p224
      $region66: #{tpu_custom_call.1} parent=59 // pred_check_branch
        %1180 = sbr.rel (%p1178) target = $region68
      $region67: #{tpu_custom_call.1} parent=59 // pred_region
        %p1181 = scmp.lt.s32.totalorder %s26, 1
        %s1182 = scalar_select %p1181, %s26, 1
        %p1183 = scmp.lt.s32.totalorder %s27, 0
        %s1184 = scalar_select %p1183, %s27, 0
        %s1185 = smul.addr %s1184, 16
        %s1186 = smul.addr %s1182, 16
        %s1187 = sadd.s32 %s1185, %s1186
        %s1188 = smul.addr %s1187, 8
        %s1189 = scalar_lea.vmem %s7, %s1188
      $region68: #{tpu_custom_call.1} parent=59 // pred_fallthru
        _
      // Predicated region
      $region69: #{tpu_custom_call.1} parent=59 // pred_check
        %p1190 = pneg %p252
      $region70: #{tpu_custom_call.1} parent=59 // pred_check_branch
        %1192 = sbr.rel (%p1190) target = $region72
      $region71: #{tpu_custom_call.1} parent=59 // pred_region
        %p1193 = scmp.lt.s32.totalorder %s26, 1
        %s1194 = scalar_select %p1193, %s26, 1
        %p1195 = scmp.lt.s32.totalorder %s27, 0
        %s1196 = scalar_select %p1195, %s27, 0
        %s1197 = sadd.s32 %s1196, %s1194
        %s1198 = scalar_lea.vmem %s8, %s1197
      $region72: #{tpu_custom_call.1} parent=59 // pred_fallthru
        _
    $region60: #{tpu_custom_call.1} parent=5 // pred_fallthru
      _
  $region6: #{tpu_custom_call.1} parent=0 // loop_footer
    %s19 = sadd.s32 1, %s15
  $region7: #{tpu_custom_call.1} parent=0 // loop_footer_branch
    %14 = sbr.rel target = $region3
  $region8: #{tpu_custom_call.1} parent=0 // loop_exit
    _

</llo_original>
